<compile_context>
chip_gen: v5e
topology: v5e:2x2
jax: 0.10.0
libtpu: 0.0.40
codegen_flags: <defaults>
</compile_context>

<pallas_src>
import jax
import jax.numpy as jnp
from jax.experimental import pallas as pl
from jax.experimental.pallas import tpu as pltpu

# ---- small config consistent with BertOutput (intermediate = 4 * hidden) ----
BATCH = 2
SEQ = 8
HIDDEN = 32
INTERMEDIATE = 4 * HIDDEN      # 128
LN_EPS = 1e-12


def bert_output_kernel(hs_ref, res_ref, w_ref, b_ref, gamma_ref, beta_ref, out_ref):
    # hs_ref    : (R, I)  flattened intermediate activations, R = B*S, fp32
    # res_ref   : (R, H)  residual input_tensor, fp32
    # w_ref     : (I, H)  dense weight (== PyTorch weight.T), bfloat16
    # b_ref     : (1, H)  dense bias, fp32
    # gamma_ref : (1, H)  LayerNorm weight, fp32
    # beta_ref  : (1, H)  LayerNorm bias, fp32
    x = hs_ref[...]

    # Dense: bf16 MXU matmul with fp32 accumulation.
    y = jnp.dot(x.astype(jnp.bfloat16), w_ref[...],
                preferred_element_type=jnp.float32)
    y = y + b_ref[...]                                   # (R, H) + (1, H)

    # Dropout is identity in eval mode.

    # Residual + LayerNorm (all fp32 elementwise).
    z = y + res_ref[...]
    mean = jnp.mean(z, axis=-1, keepdims=True)
    var = jnp.mean((z - mean) ** 2, axis=-1, keepdims=True)
    zn = (z - mean) * jax.lax.rsqrt(var + LN_EPS)
    out_ref[...] = (zn * gamma_ref[...] + beta_ref[...]).astype(out_ref.dtype)


def bert_output(hidden_states, input_tensor, params):
    """hidden_states: (B, S, I) fp32, input_tensor: (B, S, H) fp32."""
    B, S, I = hidden_states.shape
    H = input_tensor.shape[-1]
    w, b, gamma, beta = params

    hs2d = hidden_states.reshape(B * S, I)
    res2d = input_tensor.reshape(B * S, H)

    vmem = pl.BlockSpec(memory_space=pltpu.MemorySpace.VMEM)
    out2d = pl.pallas_call(
        bert_output_kernel,
        out_shape=jax.ShapeDtypeStruct((B * S, H), jnp.float32),
        in_specs=[vmem, vmem, vmem, vmem, vmem, vmem],
        out_specs=vmem,
    )(hs2d, res2d, w, b, gamma, beta)

    return out2d.reshape(B, S, H)


def init_params(key, intermediate, hidden):
    k_w, k_b = jax.random.split(key, 2)
    std = 0.02
    w = (jax.random.normal(k_w, (intermediate, hidden), jnp.float32) * std
         ).astype(jnp.bfloat16)                     # bf16 weight for the MXU dot
    b = jax.random.normal(k_b, (1, hidden), jnp.float32) * std
    gamma = jnp.ones((1, hidden), jnp.float32)
    beta = jnp.zeros((1, hidden), jnp.float32)
    return (w, b, gamma, beta)


if __name__ == "__main__":
    key = jax.random.PRNGKey(0)
    k_hs, k_res, k_p = jax.random.split(key, 3)

    hidden_states = jax.random.normal(k_hs, (BATCH, SEQ, INTERMEDIATE), jnp.float32)
    input_tensor = jax.random.normal(k_res, (BATCH, SEQ, HIDDEN), jnp.float32)
    params = init_params(k_p, INTERMEDIATE, HIDDEN)

    out = bert_output(hidden_states, input_tensor, params)
    out = jax.block_until_ready(out)
    assert out.shape == (BATCH, SEQ, HIDDEN)

    # Pure-JAX reference (eval-mode module semantics), generous tolerance for
    # the bf16 matmul operands.
    w, b, gamma, beta = params
    y_ref = hidden_states.reshape(-1, INTERMEDIATE) @ w.astype(jnp.float32) + b
    z_ref = y_ref + input_tensor.reshape(-1, HIDDEN)
    mean = z_ref.mean(-1, keepdims=True)
    var = ((z_ref - mean) ** 2).mean(-1, keepdims=True)
    ref = ((z_ref - mean) * jax.lax.rsqrt(var + LN_EPS)) * gamma + beta
    ref = ref.reshape(BATCH, SEQ, HIDDEN)
    assert jnp.allclose(out, ref, atol=5e-2, rtol=5e-2), float(jnp.max(jnp.abs(out - ref)))

    print("KERNEL_OK")
</pallas_src>

<mosaic_0001>
module attributes {stable_mosaic.version = 11 : i64} {
  func.func @bert_output_kernel(%arg0: memref<16x128xf32, #tpu.memory_space<vmem>>, %arg1: memref<16x32xf32, #tpu.memory_space<vmem>>, %arg2: memref<128x32xbf16, #tpu.memory_space<vmem>>, %arg3: memref<1x32xf32, #tpu.memory_space<vmem>>, %arg4: memref<1x32xf32, #tpu.memory_space<vmem>>, %arg5: memref<1x32xf32, #tpu.memory_space<vmem>>, %arg6: memref<16x32xf32, #tpu.memory_space<vmem>>) attributes {dimension_semantics = [], scalar_prefetch = 0 : i64, scratch_operands = 0 : i64, tpu.core_type = #tpu.core_type<tc>} {
    %c0 = arith.constant 0 : index
    %c0_0 = arith.constant 0 : index
    %0 = vector.load %arg0[%c0, %c0_0] : memref<16x128xf32, #tpu.memory_space<vmem>>, vector<16x128xf32>
    %1 = arith.truncf %0 : vector<16x128xf32> to vector<16x128xbf16>
    %c0_1 = arith.constant 0 : index
    %c0_2 = arith.constant 0 : index
    %2 = vector.load %arg2[%c0_1, %c0_2] : memref<128x32xbf16, #tpu.memory_space<vmem>>, vector<128x32xbf16>
    %cst = arith.constant dense<0.000000e+00> : vector<16x32xf32>
    %3 = tpu.matmul %1, %2, %cst {dimension_numbers = #tpu.dot_dimension_numbers<[1], [0], [0], [1], [0, 0, 1, 1], [], []>} : vector<16x128xbf16>, vector<128x32xbf16>, vector<16x32xf32> -> vector<16x32xf32>
    %c0_3 = arith.constant 0 : index
    %c0_4 = arith.constant 0 : index
    %4 = vector.load %arg3[%c0_3, %c0_4] : memref<1x32xf32, #tpu.memory_space<vmem>>, vector<1x32xf32>
    %5 = vector.broadcast %4 : vector<1x32xf32> to vector<16x32xf32>
    %6 = arith.addf %3, %5 : vector<16x32xf32>
    %c0_5 = arith.constant 0 : index
    %c0_6 = arith.constant 0 : index
    %7 = vector.load %arg1[%c0_5, %c0_6] : memref<16x32xf32, #tpu.memory_space<vmem>>, vector<16x32xf32>
    %8 = arith.addf %6, %7 : vector<16x32xf32>
    %cst_7 = arith.constant dense<0.000000e+00> : vector<16xf32>
    %9 = vector.multi_reduction <add>, %8, %cst_7 [1] : vector<16x32xf32> to vector<16xf32>
    %10 = vector.shape_cast %9 : vector<16xf32> to vector<16x1xf32>
    %cst_8 = arith.constant 3.200000e+01 : f32
    %11 = vector.broadcast %cst_8 : f32 to vector<16x1xf32>
    %12 = arith.divf %10, %11 : vector<16x1xf32>
    %13 = vector.broadcast %12 : vector<16x1xf32> to vector<16x32xf32>
    %14 = arith.subf %8, %13 : vector<16x32xf32>
    %15 = arith.mulf %14, %14 : vector<16x32xf32>
    %cst_9 = arith.constant dense<0.000000e+00> : vector<16xf32>
    %16 = vector.multi_reduction <add>, %15, %cst_9 [1] : vector<16x32xf32> to vector<16xf32>
    %17 = vector.shape_cast %16 : vector<16xf32> to vector<16x1xf32>
    %cst_10 = arith.constant 3.200000e+01 : f32
    %18 = vector.broadcast %cst_10 : f32 to vector<16x1xf32>
    %19 = arith.divf %17, %18 : vector<16x1xf32>
    %20 = vector.broadcast %12 : vector<16x1xf32> to vector<16x32xf32>
    %21 = arith.subf %8, %20 : vector<16x32xf32>
    %cst_11 = arith.constant 9.99999996E-13 : f32
    %22 = vector.broadcast %cst_11 : f32 to vector<16x1xf32>
    %23 = arith.addf %19, %22 : vector<16x1xf32>
    %24 = math.rsqrt %23 : vector<16x1xf32>
    %25 = vector.broadcast %24 : vector<16x1xf32> to vector<16x32xf32>
    %26 = arith.mulf %21, %25 : vector<16x32xf32>
    %c0_12 = arith.constant 0 : index
    %c0_13 = arith.constant 0 : index
    %27 = vector.load %arg4[%c0_12, %c0_13] : memref<1x32xf32, #tpu.memory_space<vmem>>, vector<1x32xf32>
    %28 = vector.broadcast %27 : vector<1x32xf32> to vector<16x32xf32>
    %29 = arith.mulf %26, %28 : vector<16x32xf32>
    %c0_14 = arith.constant 0 : index
    %c0_15 = arith.constant 0 : index
    %30 = vector.load %arg5[%c0_14, %c0_15] : memref<1x32xf32, #tpu.memory_space<vmem>>, vector<1x32xf32>
    %31 = vector.broadcast %30 : vector<1x32xf32> to vector<16x32xf32>
    %32 = arith.addf %29, %31 : vector<16x32xf32>
    %c0_16 = arith.constant 0 : index
    %c0_17 = arith.constant 0 : index
    %33 = vector.load %arg6[%c0_16, %c0_17] : memref<16x32xf32, #tpu.memory_space<vmem>>, vector<16x32xf32>
    tpu.vector_store %arg6[%c0_16, %c0_17], %32 {strides = array<i32>} : memref<16x32xf32, #tpu.memory_space<vmem>>, vector<16x32xf32>,
    return
  }
}

</mosaic_0001>

<llo_original>
// kernel: tpu_custom_call.1
$region0: #{tpu_custom_call.1}
  #allocation0 [shape = 'u32[]', space=smem, size = 0x4, offset = 0x4, fixed_abs, tag = 'smem constant byte address 0x4 - core index']
  #allocation1 [shape = 'u32[72,128]{1,0:T(1,128)}', space=vmem, size = 0x9000, scoped, tag = 'internal scratch']
  %s0 = inlined_call_operand.vmem [shape: f32[16,128], index: 0, kind: input, shape index: {}]
  %s1 = inlined_call_operand.vmem [shape: f32[16,32], index: 1, kind: input, shape index: {}]
  %s2 = inlined_call_operand.vmem [shape: bf16[128,32], index: 2, kind: input, shape index: {}]
  %s3 = inlined_call_operand.vmem [shape: f32[1,32], index: 3, kind: input, shape index: {}]
  %s4 = inlined_call_operand.vmem [shape: f32[1,32], index: 4, kind: input, shape index: {}]
  %s5 = inlined_call_operand.vmem [shape: f32[1,32], index: 5, kind: input, shape index: {}]
  %s6 = inlined_call_operand.hbm [shape: f32[16,32], index: 6, kind: output, shape index: {}]
  %s7 = sld [smem:[#allocation0]]
  $region34: #{tpu_custom_call.1} parent=0
    _
  %s9 = ssub.s32 1, %s7
  %s10 = scalar_select 0, %s9, %s7
  $region1: #{tpu_custom_call.1} parent=0
    #allocation2 [shape = 'u8[8192]{0}', space=vmem, size = 0x2000, scoped, tag = 'output window, operand 0, single buffered']
    #allocation3 [shape = 's32[1]{0}', space=sflag, size = 0x4, scoped, tag = 'scoped memory for tpu_custom_call.1']
    %11 = vsyncpa [#allocation3], 0
    // Predicated region
    $region2: #{tpu_custom_call.1} parent=1 // pred_check
      _
    $region3: #{tpu_custom_call.1} parent=1 // pred_check_branch
      %13 = sbr.rel (0) target = $region5
    $region4: #{tpu_custom_call.1} parent=1 // pred_region
      _
    $region5: #{tpu_custom_call.1} parent=1 // pred_fallthru
      _
    // Predicated region
    $region6: #{tpu_custom_call.1} parent=1 // pred_check
      _
    $region7: #{tpu_custom_call.1} parent=1 // pred_check_branch
      %15 = sbr.rel (0) target = $region9
    $region8: #{tpu_custom_call.1} parent=1 // pred_region
      _
    $region9: #{tpu_custom_call.1} parent=1 // pred_fallthru
      _
    // Predicated region
    $region10: #{tpu_custom_call.1} parent=1 // pred_check
      _
    $region11: #{tpu_custom_call.1} parent=1 // pred_check_branch
      %17 = sbr.rel (0) target = $region13
    $region12: #{tpu_custom_call.1} parent=1 // pred_region
      _
    $region13: #{tpu_custom_call.1} parent=1 // pred_fallthru
      _
    // Predicated region
    $region14: #{tpu_custom_call.1} parent=1 // pred_check
      _
    $region15: #{tpu_custom_call.1} parent=1 // pred_check_branch
      %19 = sbr.rel (0) target = $region17
    $region16: #{tpu_custom_call.1} parent=1 // pred_region
      _
    $region17: #{tpu_custom_call.1} parent=1 // pred_fallthru
      _
    // Predicated region
    $region18: #{tpu_custom_call.1} parent=1 // pred_check
      _
    $region19: #{tpu_custom_call.1} parent=1 // pred_check_branch
      %21 = sbr.rel (0) target = $region21
    $region20: #{tpu_custom_call.1} parent=1 // pred_region
      _
    $region21: #{tpu_custom_call.1} parent=1 // pred_fallthru
      _
    // Predicated region
    $region22: #{tpu_custom_call.1} parent=1 // pred_check
      _
    $region23: #{tpu_custom_call.1} parent=1 // pred_check_branch
      %23 = sbr.rel (0) target = $region25
    $region24: #{tpu_custom_call.1} parent=1 // pred_region
      _
    $region25: #{tpu_custom_call.1} parent=1 // pred_fallthru
      _
    %v24 = vld [vmem:[%s0] sm:$0xff]
    %v25 = vld [vmem:[%s0 + $0x8] sm:$0xff]
    %v26 = vpack.c.bf16 %v25, %v24
    %v27 = vld [vmem:[%s2] sm:$0xf]
    %v28 = vld [vmem:[%s2 + $0x4] sm:$0xf]
    %v29 = vld [vmem:[%s2 + $0x8] sm:$0xf]
    %v30 = vld [vmem:[%s2 + $0xc] sm:$0xf]
    %v31 = vld [vmem:[%s2 + $0x10] sm:$0xf]
    %v32 = vld [vmem:[%s2 + $0x14] sm:$0xf]
    %v33 = vld [vmem:[%s2 + $0x18] sm:$0xf]
    %v34 = vld [vmem:[%s2 + $0x1c] sm:$0xf]
    %v35 = vld [vmem:[%s2 + $0x20] sm:$0xf]
    %v36 = vld [vmem:[%s2 + $0x24] sm:$0xf]
    %v37 = vld [vmem:[%s2 + $0x28] sm:$0xf]
    %v38 = vld [vmem:[%s2 + $0x2c] sm:$0xf]
    %v39 = vld [vmem:[%s2 + $0x30] sm:$0xf]
    %v40 = vld [vmem:[%s2 + $0x34] sm:$0xf]
    %v41 = vld [vmem:[%s2 + $0x38] sm:$0xf]
    %v42 = vld [vmem:[%s2 + $0x3c] sm:$0xf]
    %v43 = vld [vmem:[%s3] sm:$0x1]
    %v45 = vperm.slane %v43, 0
    %v63 = vunpack.c.l.b16 %v27
    %v64 = vunpack.c.l.b16 %v28
    %v65 = vunpack.c.l.b16 %v29
    %v66 = vunpack.c.l.b16 %v30
    %v67 = vunpack.c.l.b16 %v31
    %v68 = vunpack.c.l.b16 %v32
    %v69 = vunpack.c.l.b16 %v33
    %v70 = vunpack.c.l.b16 %v34
    %v71 = vunpack.c.l.b16 %v35
    %v72 = vunpack.c.l.b16 %v36
    %v73 = vunpack.c.l.b16 %v37
    %v74 = vunpack.c.l.b16 %v38
    %v75 = vunpack.c.l.b16 %v39
    %v76 = vunpack.c.l.b16 %v40
    %v77 = vunpack.c.l.b16 %v41
    %v78 = vunpack.c.l.b16 %v42
    %v79 = vpack.c.b16 %v64, %v63
    %v80 = vpack.c.b16 %v66, %v65
    %v81 = vpack.c.b16 %v68, %v67
    %v82 = vpack.c.b16 %v70, %v69
    %v83 = vpack.c.b16 %v72, %v71
    %v84 = vpack.c.b16 %v74, %v73
    %v85 = vpack.c.b16 %v76, %v75
    %v86 = vpack.c.b16 %v78, %v77
    %95 = vmatpush.bf16.msra.mxu0 %v86
    %96 = vmatpush.bf16.msra.mxu0 %v85
    %97 = vmatpush.bf16.msra.mxu0 %v84
    %98 = vmatpush.bf16.msra.mxu0 %v83
    %99 = vmatpush.bf16.msra.mxu0 %v82
    %100 = vmatpush.bf16.msra.mxu0 %v81
    %101 = vmatpush.bf16.msra.mxu0 %v80
    %102 = vmatpush.bf16.msra.mxu0 %v79
    %103 = vmatmul.bf16.gmra.mxu0 %v26
    %v104 = vpop.f32.mrf.mxu0
    %v105 = vadd.f32 %v45, %v104
    %v106 = vpop.f32.mrf.mxu0
    %v107 = vadd.f32 %v45, %v106
    %108 = vdwg.mxu0
    %v109 = vld [vmem:[%s1] sm:$0xff]
    %v110 = vld [vmem:[%s1 + $0x8] sm:$0xff]
    %v111 = vadd.f32 %v105, %v109
    %v112 = vadd.f32 %v107, %v110
    %vm113 = vcmask 261120
    %v114 = vsel %vm113, %v111, 0.0
    %115 = vadd.xlane.f32.xlu0 %v114
    %v116 = vpop.xlane.xlu0 %115
    %v117 = vsel %vm113, %v112, 0.0
    %118 = vadd.xlane.f32.xlu0 %v117
    %v119 = vpop.xlane.xlu0 %118
    %v120 = vrcp.pop 32.0
    %v121 = vmul.f32 32.0, %v120
    %v122 = vsub.f32 1.0, %v121
    %v123 = vmul.f32 %v120, %v122
    %v124 = vadd.f32 %v120, %v123
    %vm125 = vweird.f32 %v120
    %v126 = vsel %vm125, %v120, %v124
    %v127 = vmul.f32 %v116, %v126
    %v128 = vmul.f32 %v119, %v126
    %v129 = vsub.f32 %v111, %v127
    %v130 = vsub.f32 %v112, %v128
    %v131 = vmul.f32 %v129, %v129
    %v132 = vmul.f32 %v130, %v130
    %v133 = vsel %vm113, %v131, 0.0
    %134 = vadd.xlane.f32.xlu0 %v133
    %v135 = vpop.xlane.xlu0 %134
    %v136 = vsel %vm113, %v132, 0.0
    %137 = vadd.xlane.f32.xlu0 %v136
    %v138 = vpop.xlane.xlu0 %137
    %v139 = vmul.f32 %v135, %v126
    %v140 = vmul.f32 %v138, %v126
    %v141 = vadd.f32 %v139, 1e-12
    %v142 = vadd.f32 %v140, 1e-12
    %v143 = vrsqrt.pop %v141
    %v144 = vmul.f32 %v143, %v141
    %v145 = vmul.f32 %v144, %v143
    %v146 = vmul.f32 0.5, %v145
    %v147 = vsub.f32 1.5, %v146
    %v148 = vmul.f32 %v143, %v147
    %vm149 = vweird.f32 %v141
    %vm150 = vweird.f32 %v143
    %vm151 = vmor %vm149, %vm150
    %v152 = vsel %vm151, %v143, %v148
    %v153 = vrsqrt.pop %v142
    %v154 = vmul.f32 %v153, %v142
    %v155 = vmul.f32 %v154, %v153
    %v156 = vmul.f32 0.5, %v155
    %v157 = vsub.f32 1.5, %v156
    %v158 = vmul.f32 %v153, %v157
    %vm159 = vweird.f32 %v142
    %vm160 = vweird.f32 %v153
    %vm161 = vmor %vm159, %vm160
    %v162 = vsel %vm161, %v153, %v158
    %v163 = vmul.f32 %v129, %v152
    %v164 = vmul.f32 %v130, %v162
    %v165 = vld [vmem:[%s4] sm:$0x1]
    %v167 = vperm.slane %v165, 0
    %v169 = vmul.f32 %v163, %v167
    %v170 = vmul.f32 %v164, %v167
    %v171 = vld [vmem:[%s5] sm:$0x1]
    %v173 = vperm.slane %v171, 0
    %v175 = vadd.f32 %v169, %v173
    %v176 = vadd.f32 %v170, %v173
    %177 = vst.msk [vmem:[#allocation2] sm:$0xff] %vm113, %v175
    %178 = vst.msk [vmem:[#allocation2 + $0x8] sm:$0xff] %vm113, %v176
    // Predicated region
    $region26: #{tpu_custom_call.1} parent=1 // pred_check
      _
    $region27: #{tpu_custom_call.1} parent=1 // pred_check_branch
      %180 = sbr.rel (0) target = $region29
    $region28: #{tpu_custom_call.1} parent=1 // pred_region
      %182 = vsyncadd [#allocation3], 0
      %s183 = sshll.u32 [#allocation2], 4
      %s184 = int_to_ptr.vmem [resolvable:$true] %s183
      %s185 = sshll.u32 %s6, 4
      %s186 = int_to_ptr.hbm [resolvable:$true] %s185
      %191 = dma.vmem_to_hbm [thread:$0]  %s184, 256, %s186, [#allocation3], 128, 128, 8
    $region29: #{tpu_custom_call.1} parent=1 // pred_fallthru
      _
    // Predicated region
    $region30: #{tpu_custom_call.1} parent=1 // pred_check
      _
    $region31: #{tpu_custom_call.1} parent=1 // pred_check_branch
      %193 = sbr.rel (0) target = $region33
    $region32: #{tpu_custom_call.1} parent=1 // pred_region
      %195 = dma.done [#allocation3], 256
    $region33: #{tpu_custom_call.1} parent=1 // pred_fallthru
      _
    %196 = vsyncpa [#allocation3], 1

</llo_original>
